<compile_context>
chip_gen: v5e
topology: v5e:2x2
jax: 0.10.0
libtpu: 0.0.40
codegen_flags: <defaults>
</compile_context>

<pallas_src>
import functools

import jax
import jax.numpy as jnp
from jax.experimental import pallas as pl
from jax.experimental.pallas import tpu as pltpu


def _ce_num_kernel(pred_ref, oh_ref, w_ref, *rest, pack, lanes, tile_rows):
    """Accumulates the weighted-NLL numerator into a resident (1, 8, lanes) block."""
    if pack > 1:
        seg_ref, out_ref = rest
    else:
        (out_ref,) = rest

    ki = pl.program_id(1)

    @pl.when(ki == 0)
    def _init():
        out_ref[...] = jnp.zeros_like(out_ref)

    x = pred_ref[...].astype(jnp.float32)          # (TR, L) packed logits
    m = jnp.max(x, axis=-1, keepdims=True)         # shared packed-row max
    e = jnp.exp(x - m)                             # full-lane-width EUP

    if pack > 1:
        # Per-sample (segmented) exp-sum via 0/1 block-diagonal matmul on the
        # otherwise idle MXU.  HIGHEST => multi-pass bf16 with f32 accumulate,
        # so no hi/lo split is needed for ~f32 accuracy.
        s = jnp.dot(e, seg_ref[...],
                    precision=jax.lax.Precision.HIGHEST,
                    preferred_element_type=jnp.float32)      # (TR, L)
    else:
        s = jnp.sum(e, axis=-1, keepdims=True)               # (TR, 1)
    s = jnp.maximum(s, 1e-30)          # guard: all-underflow segment -> no NaN
    lse = jnp.log(s) + m               # per-sample logsumexp (broadcast per seg)

    # One-hot(target) * class weight; padded samples carry an all-zero one-hot
    # row so they contribute exactly zero.
    w_t = oh_ref[...].astype(jnp.float32) * w_ref[...]        # (TR, L)
    contrib = w_t * (lse - x)

    # Sublane add-tree: fold the (TR, L) contribution into one vreg-sized
    # accumulator (the resident output block) -> VMEM does not scale with TR.
    out_ref[...] += jnp.sum(
        contrib.reshape(tile_rows // 8, 8, lanes), axis=0).reshape(1, 8, lanes)


def _round_up(v, m):
    return -(-v // m) * m


def cross_entropy_loss(pred, target, trans_feat, weight, *, block_rows=4096,
                       ncores=2):
    """Pallas equivalent of get_loss.forward(pred, target, trans_feat, weight)."""
    del trans_feat                                  # unused by the reference module
    n, c = pred.shape
    target = target.astype(jnp.int32).reshape(-1)
    weight = weight.astype(jnp.float32)

    # Denominator sum_i w[t_i]: negligible gather+reduce on the XLA side.
    den = jnp.sum(weight[target])

    # Lane-pack P samples per packed row when the class count divides 128.
    pack = 128 // c if (c <= 128 and 128 % c == 0) else 1
    lanes = pack * c
    n_rows = pl.cdiv(n, pack)

    # Generation-aware tile cap + explicit VMEM limit.
    try:
        vmem_cap = int(pltpu.get_tpu_info().vmem_capacity_bytes)
    except Exception:
        vmem_cap = 64 << 20
    bytes_per_row = 2 * lanes * (pred.dtype.itemsize + 1)   # dbl-buffered pred + one-hot
    cap_rows = max(32, (vmem_cap // 4) // bytes_per_row // 32 * 32)
    tr = min(_round_up(max(block_rows, 32), 32), cap_rows,
             _round_up(pl.cdiv(n_rows, ncores), 32))
    nsteps = pl.cdiv(n_rows, ncores * tr)
    rows_total = ncores * nsteps * tr
    n_total = rows_total * pack

    # Pad in the wrapper (pred=0, target=-1): the kernel needs no validity
    # masking and every index_map tile is in range.
    if n_total != n:
        pred = jnp.pad(pred, ((0, n_total - n), (0, 0)))
        target_p = jnp.pad(target, (0, n_total - n), constant_values=-1)
    else:
        target_p = target
    pred_packed = pred.reshape(rows_total, lanes)            # free row-major reshape

    # Lane-dense int8 one-hot(target): replaces the old padded int32 target
    # tile and the in-kernel "expand" matmul / lane compare.
    onehot = (target_p[:, None] == jnp.arange(c, dtype=jnp.int32)[None, :])
    onehot_packed = onehot.astype(jnp.int8).reshape(rows_total, lanes)

    w_row = jnp.tile(weight.reshape(1, c), (1, pack))        # (1, lanes), resident

    row_idx = lambda ci, ki: (ci * nsteps + ki, 0)
    in_specs = [
        pl.BlockSpec((tr, lanes), row_idx),                  # packed logits
        pl.BlockSpec((tr, lanes), row_idx),                  # one-hot(target), int8
        pl.BlockSpec((1, lanes), lambda ci, ki: (0, 0)),     # class weights (resident)
    ]
    args = [pred_packed, onehot_packed, w_row]
    if pack > 1:
        lane_ids = jnp.arange(lanes, dtype=jnp.int32)
        seg = (lane_ids[:, None] // c == lane_ids[None, :] // c).astype(jnp.float32)
        in_specs.append(pl.BlockSpec((lanes, lanes), lambda ci, ki: (0, 0)))
        args.append(seg)                                     # hoisted constant selector

    vmem_need = (tr * lanes * 2 * (pred.dtype.itemsize + 1)  # dbl-buffered inputs
                 + (lanes * lanes * 4 if pack > 1 else 0)    # selector
                 + 2 * 8 * lanes * 4 + lanes * 4)            # output block + weights
    vmem_limit = int(min(vmem_cap, max(2 * vmem_need, 16 << 20)))

    kernel = functools.partial(_ce_num_kernel, pack=pack, lanes=lanes, tile_rows=tr)

    num_p = pl.pallas_call(
        kernel,
        out_shape=jax.ShapeDtypeStruct((ncores, 8, lanes), jnp.float32),
        grid_spec=pltpu.PrefetchScalarGridSpec(
            num_scalar_prefetch=0,
            grid=(ncores, nsteps),
            in_specs=in_specs,
            out_specs=pl.BlockSpec((1, 8, lanes), lambda ci, ki: (ci, 0, 0)),
        ),
        compiler_params=pltpu.CompilerParams(
            dimension_semantics=("parallel", "arbitrary"),
            vmem_limit_bytes=vmem_limit,
        ),
        cost_estimate=pl.CostEstimate(
            flops=int(rows_total * (2 * lanes * lanes + 8 * lanes)),
            transcendentals=int(2 * rows_total * lanes),
            bytes_accessed=int(rows_total * lanes * (pred.dtype.itemsize + 1)
                               + (lanes * lanes * 4 if pack > 1 else 0)
                               + ncores * 8 * lanes * 4 + lanes * 4),
        ),
    )(*args)

    num = jnp.sum(num_p)                                     # tiny final reduce in XLA
    return (num / den).astype(jnp.float32)


def _reference_loss(pred, target, weight):
    """Pure-JAX reference of torch.nn.functional.cross_entropy(..., weight=...)."""
    logp = jax.nn.log_softmax(pred.astype(jnp.float32), axis=-1)
    logp_t = jnp.take_along_axis(logp, target[:, None].astype(jnp.int32), axis=-1)[:, 0]
    w_t = weight.astype(jnp.float32)[target]
    return jnp.sum(-w_t * logp_t) / jnp.sum(w_t)


if __name__ == "__main__":
    key = jax.random.PRNGKey(0)
    k_pred, k_tgt, k_w, k_tf = jax.random.split(key, 4)

    B, NPTS, C = 2, 999, 16             # small semseg-like shapes, N = B*NPTS
    N = B * NPTS

    pred = jax.random.normal(k_pred, (N, C), dtype=jnp.float32) * 3.0
    target = jax.random.randint(k_tgt, (N,), 0, C, dtype=jnp.int32)
    weight = jax.random.uniform(k_w, (C,), dtype=jnp.float32, minval=0.5, maxval=2.0)
    trans_feat = jax.random.normal(k_tf, (B, 16, 16), dtype=jnp.float32)  # unused

    ref = _reference_loss(pred, target, weight)

    # Default (large-tile) configuration.
    loss = jax.block_until_ready(cross_entropy_loss(pred, target, trans_feat, weight))
    assert jnp.allclose(loss, ref, atol=1e-4, rtol=1e-4), (loss, ref)

    # Small tiles: exercises multi-step accumulation into the resident output
    # block and the wrapper-side row padding.
    loss_small = jax.block_until_ready(
        cross_entropy_loss(pred, target, trans_feat, weight, block_rows=96))
    assert jnp.allclose(loss_small, ref, atol=1e-4, rtol=1e-4), (loss_small, ref)

    # bf16 logits path (halves pred HBM traffic on v5e; kernel computes in f32).
    pred_bf16 = pred.astype(jnp.bfloat16)
    ref_bf16 = _reference_loss(pred_bf16.astype(jnp.float32), target, weight)
    loss_bf16 = jax.block_until_ready(
        cross_entropy_loss(pred_bf16, target, trans_feat, weight))
    assert jnp.allclose(loss_bf16, ref_bf16, atol=1e-4, rtol=1e-4), (loss_bf16, ref_bf16)

    print("KERNEL_OK")
</pallas_src>

<mosaic_0001>
module attributes {stable_mosaic.version = 11 : i64} {
  func.func @_ce_num_kernel(%arg0: i32, %arg1: i32, %arg2: memref<128x128xf32, #tpu.memory_space<vmem>>, %arg3: memref<128x128xi8, #tpu.memory_space<vmem>>, %arg4: memref<1x128xf32, #tpu.memory_space<vmem>>, %arg5: memref<128x128xf32, #tpu.memory_space<vmem>>, %arg6: memref<1x8x128xf32, #tpu.memory_space<vmem>>) attributes {dimension_semantics = [#tpu.dimension_semantics<parallel>, #tpu.dimension_semantics<arbitrary>], iteration_bounds = array<i64: 2, 1>, scalar_prefetch = 0 : i64, scratch_operands = 0 : i64, tpu.core_type = #tpu.core_type<tc>, window_params = [{transform_indices = @transform_0, window_bounds = array<i64: 128, 128>}, {transform_indices = @transform_1, window_bounds = array<i64: 128, 128>}, {pipeline_mode = #tpu.pipeline_mode<synchronous>, transform_indices = @transform_2, window_bounds = array<i64: 1, 128>}, {pipeline_mode = #tpu.pipeline_mode<synchronous>, transform_indices = @transform_3, window_bounds = array<i64: 128, 128>}, {transform_indices = @transform_4, window_bounds = array<i64: 1, 8, 128>}]} {
    %c0_i32 = arith.constant 0 : i32
    %0 = arith.cmpi eq, %arg1, %c0_i32 : i32
    %1 = arith.extui %0 : i1 to i32
    %c0_i32_0 = arith.constant 0 : i32
    %2 = arith.cmpi ne, %1, %c0_i32_0 : i32
    scf.if %2 {
      %cst_17 = arith.constant 0.000000e+00 : f32
      %29 = vector.broadcast %cst_17 : f32 to vector<1x8x128xf32>
      %c0_18 = arith.constant 0 : index
      %c0_19 = arith.constant 0 : index
      %c0_20 = arith.constant 0 : index
      %30 = vector.load %arg6[%c0_18, %c0_19, %c0_20] : memref<1x8x128xf32, #tpu.memory_space<vmem>>, vector<1x8x128xf32>
      tpu.vector_store %arg6[%c0_18, %c0_19, %c0_20], %29 {strides = array<i32>} : memref<1x8x128xf32, #tpu.memory_space<vmem>>, vector<1x8x128xf32>,
    } else {
    }
    %c0 = arith.constant 0 : index
    %c0_1 = arith.constant 0 : index
    %3 = vector.load %arg2[%c0, %c0_1] : memref<128x128xf32, #tpu.memory_space<vmem>>, vector<128x128xf32>
    %cst = arith.constant dense<0xFF800000> : vector<128xf32>
    %4 = vector.multi_reduction <maximumf>, %3, %cst [1] : vector<128x128xf32> to vector<128xf32>
    %5 = vector.shape_cast %4 : vector<128xf32> to vector<128x1xf32>
    %6 = vector.broadcast %5 : vector<128x1xf32> to vector<128x128xf32>
    %7 = arith.subf %3, %6 : vector<128x128xf32>
    %8 = math.exp %7 : vector<128x128xf32>
    %c0_2 = arith.constant 0 : index
    %c0_3 = arith.constant 0 : index
    %9 = vector.load %arg5[%c0_2, %c0_3] : memref<128x128xf32, #tpu.memory_space<vmem>>, vector<128x128xf32>
    %cst_4 = arith.constant dense<0.000000e+00> : vector<128x128xf32>
    %10 = tpu.matmul %8, %9, %cst_4 {dimension_numbers = #tpu.dot_dimension_numbers<[1], [0], [0], [1], [0, 0, 1, 1], [], []>, precision = #tpu.contract_precision<fp32>} : vector<128x128xf32>, vector<128x128xf32>, vector<128x128xf32> -> vector<128x128xf32>
    %cst_5 = arith.constant 1.000000e-30 : f32
    %11 = vector.broadcast %cst_5 : f32 to vector<128x128xf32>
    %12 = arith.maximumf %10, %11 : vector<128x128xf32>
    %13 = math.log %12 : vector<128x128xf32>
    %14 = vector.broadcast %5 : vector<128x1xf32> to vector<128x128xf32>
    %15 = arith.addf %13, %14 : vector<128x128xf32>
    %c0_6 = arith.constant 0 : index
    %c0_7 = arith.constant 0 : index
    %16 = vector.load %arg3[%c0_6, %c0_7] : memref<128x128xi8, #tpu.memory_space<vmem>>, vector<128x128xi8>
    %17 = arith.sitofp %16 : vector<128x128xi8> to vector<128x128xf32>
    %c0_8 = arith.constant 0 : index
    %c0_9 = arith.constant 0 : index
    %18 = vector.load %arg4[%c0_8, %c0_9] : memref<1x128xf32, #tpu.memory_space<vmem>>, vector<1x128xf32>
    %19 = vector.broadcast %18 : vector<1x128xf32> to vector<128x128xf32>
    %20 = arith.mulf %17, %19 : vector<128x128xf32>
    %21 = arith.subf %15, %3 : vector<128x128xf32>
    %22 = arith.mulf %20, %21 : vector<128x128xf32>
    %c0_10 = arith.constant 0 : index
    %c0_11 = arith.constant 0 : index
    %c0_12 = arith.constant 0 : index
    %23 = vector.load %arg6[%c0_10, %c0_11, %c0_12] : memref<1x8x128xf32, #tpu.memory_space<vmem>>, vector<1x8x128xf32>
    %24 = vector.shape_cast %22 : vector<128x128xf32> to vector<16x8x128xf32>
    %cst_13 = arith.constant dense<0.000000e+00> : vector<8x128xf32>
    %25 = vector.multi_reduction <add>, %24, %cst_13 [0] : vector<16x8x128xf32> to vector<8x128xf32>
    %26 = vector.shape_cast %25 : vector<8x128xf32> to vector<1x8x128xf32>
    %27 = arith.addf %23, %26 : vector<1x8x128xf32>
    %c0_14 = arith.constant 0 : index
    %c0_15 = arith.constant 0 : index
    %c0_16 = arith.constant 0 : index
    %28 = vector.load %arg6[%c0_14, %c0_15, %c0_16] : memref<1x8x128xf32, #tpu.memory_space<vmem>>, vector<1x8x128xf32>
    tpu.vector_store %arg6[%c0_14, %c0_15, %c0_16], %27 {strides = array<i32>} : memref<1x8x128xf32, #tpu.memory_space<vmem>>, vector<1x8x128xf32>,
    return
  }
  func.func @transform_0(%arg0: i32, %arg1: i32) -> (i32, i32) {
    %c1_i32 = arith.constant 1 : i32
    %0 = arith.muli %arg0, %c1_i32 : i32
    %1 = arith.addi %0, %arg1 : i32
    %c0_i32 = arith.constant 0 : i32
    %c0_i32_0 = arith.constant 0 : i32
    return %1, %c0_i32 : i32, i32
  }
  func.func @transform_1(%arg0: i32, %arg1: i32) -> (i32, i32) {
    %c1_i32 = arith.constant 1 : i32
    %0 = arith.muli %arg0, %c1_i32 : i32
    %1 = arith.addi %0, %arg1 : i32
    %c0_i32 = arith.constant 0 : i32
    %c0_i32_0 = arith.constant 0 : i32
    return %1, %c0_i32 : i32, i32
  }
  func.func @transform_2(%arg0: i32, %arg1: i32) -> (i32, i32) {
    %c0_i32 = arith.constant 0 : i32
    %c0_i32_0 = arith.constant 0 : i32
    %c0_i32_1 = arith.constant 0 : i32
    return %c0_i32, %c0_i32_0 : i32, i32
  }
  func.func @transform_3(%arg0: i32, %arg1: i32) -> (i32, i32) {
    %c0_i32 = arith.constant 0 : i32
    %c0_i32_0 = arith.constant 0 : i32
    %c0_i32_1 = arith.constant 0 : i32
    return %c0_i32, %c0_i32_0 : i32, i32
  }
  func.func @transform_4(%arg0: i32, %arg1: i32) -> (i32, i32, i32) {
    %c0_i32 = arith.constant 0 : i32
    %c0_i32_0 = arith.constant 0 : i32
    %c0_i32_1 = arith.constant 0 : i32
    return %arg0, %c0_i32, %c0_i32_0 : i32, i32, i32
  }
}

</mosaic_0001>

<llo_original>
// kernel: tpu_custom_call.1
$region0: #{tpu_custom_call.1}
  #allocation0 [shape = 'u32[]', space=smem, size = 0x4, offset = 0x4, fixed_abs, tag = 'smem constant byte address 0x4 - core index']
  #allocation1 [shape = 'u32[72,128]{1,0:T(1,128)}', space=vmem, size = 0x9000, scoped, tag = 'internal scratch']
  %s0 = inlined_call_operand.hbm [shape: f32[256,128], index: 0, kind: input, shape index: {}]
  %s1 = inlined_call_operand.hbm [shape: s8[256,128], index: 1, kind: input, shape index: {}]
  %s2 = inlined_call_operand.vmem [shape: f32[1,128], index: 2, kind: input, shape index: {}]
  %s3 = inlined_call_operand.hbm [shape: f32[128,128], index: 3, kind: input, shape index: {}]
  %s4 = inlined_call_operand.hbm [shape: f32[2,8,128], index: 4, kind: output, shape index: {}]
  %s5 = sld [smem:[#allocation0]]
  $region65: #{tpu_custom_call.1} parent=0
    _
  %s7 = ssub.s32 1, %s5
  %s8 = scalar_select 0, %s7, %s5
  $region1: #{tpu_custom_call.1} parent=0
    #allocation2 [shape = 'u8[131072]{0}', space=vmem, size = 0x20000, scoped, tag = 'input window, operand 0']
    #allocation3 [shape = 's32[2]{0}', space=sflag, size = 0x8, scoped, tag = 'scoped memory for tpu_custom_call.1']
    #allocation4 [shape = 's32[2]{0}', space=sflag, size = 0x8, scoped, tag = 'scoped memory for tpu_custom_call.1']
    #allocation5 [shape = 'u8[32768]{0}', space=vmem, size = 0x8000, scoped, tag = 'input window, operand 1']
    #allocation6 [shape = 's32[2]{0}', space=sflag, size = 0x8, scoped, tag = 'scoped memory for tpu_custom_call.1']
    #allocation7 [shape = 'u8[65536]{0}', space=vmem, size = 0x10000, scoped, tag = 'input window, operand 3, single buffered']
    #allocation8 [shape = 'u8[8192]{0}', space=vmem, size = 0x2000, scoped, tag = 'output window, operand 0']
    %9 = vsyncpa [#allocation3], 0
    %s10 = scalar_lea.sflag [#allocation3], 1
    %11 = vsyncpa %s10, 0
    %12 = vsyncpa [#allocation6], 0
    %s13 = scalar_lea.sflag [#allocation6], 1
    %14 = vsyncpa %s13, 0
    %15 = vsyncpa [#allocation4], 0
    %s16 = scalar_lea.sflag [#allocation4], 1
    %17 = vsyncpa %s16, 0
    loop: start=0, step=1, limit=4
    $region2: #{tpu_custom_call.1} parent=1 // loop_pre_header
      _
    $region3: #{tpu_custom_call.1} parent=1 // loop_header
      %s19 = sphi 0, %s23
      %p20 = scmp.ge.s32.totalorder %s19, 4
      %s26 = sphi 0, %s38
      %s27 = sphi 0, %s34
      %s28 = sphi 0, %s26
      %s29 = sphi 0, %s27
      %s30 = sphi 0, %s28
      %s31 = sphi 0, %s29
      %s43 = sphi 0, %s45
      %s46 = sphi 0, %s43
      %s47 = sphi 0, %s46
      %s63 = sphi 0, %s47
      %s71 = sphi 0, %s73
      %s74 = sphi 0, %s71
      %s75 = sphi 0, %s74
      %s91 = sphi 0, %s75
      %s95 = sphi 0, %s95
      %s97 = sphi 0, %s95
      %s98 = sphi 0, %s97
      %s112 = sphi 0, %s98
      %s116 = sphi 0, %s116
      %s118 = sphi 0, %s116
      %s119 = sphi 0, %s118
      %s133 = sphi 0, %s119
      %s139 = sphi 0, %s141
      %s142 = sphi 0, %s139
      %s143 = sphi 0, %s142
      %s159 = sphi 0, %s143
    $region4: #{tpu_custom_call.1} parent=1 // loop_header_branch
      %22 = sbr.rel (%p20) target = $region8
    $region5: #{tpu_custom_call.1} parent=1 // loop_body
      %s24 = ssub.s32 %s19, 1
      %s25 = ssub.s32 %s19, 2
      %s32 = sadd.s32 1, %s27
      %p33 = scmp.ge.s32.totalorder %s32, 1
      %s34 = scalar_select %p33, 0, %s32
      %s35 = sadd.s32 1, %s26
      %s36 = scalar_select %p33, %s35, %s26
      %p37 = scmp.ge.s32.totalorder %s36, 2
      %s38 = scalar_select %p37, 0, %s36
      %s39 = sadd.s32 %s26, %s27
      %s40 = sadd.s32 %s38, %s34
      %s41 = ssub.s32 %s39, %s40
      %p42 = scmp.eq.s32.totalorder %s41, 0
      %s44 = sadd.s32 %s43, 1
      %s45 = scalar_select %p42, %s43, %s44
      %p48 = pneg %p42
      %p49 = scmp.eq.s32.totalorder %s19, 1
      %p50 = por %p48, %p49
      %p51 = scmp.ne.s32.totalorder %s43, %s46
      %p52 = scmp.eq.s32.totalorder %s19, 0
      %p53 = por %p51, %p52
      %p54 = scmp.ne.s32.totalorder %s43, %s46
      %p55 = scmp.eq.s32.totalorder %s24, 1
      %p56 = por %p54, %p55
      %p57 = scmp.ne.s32.totalorder %s46, %s47
      %p58 = scmp.eq.s32.totalorder %s24, 0
      %p59 = por %p57, %p58
      %p60 = scmp.ne.s32.totalorder %s46, %s47
      %p61 = scmp.eq.s32.totalorder %s25, 1
      %p62 = por %p60, %p61
      %p64 = scmp.ne.s32.totalorder %s47, %s63
      %p65 = scmp.eq.s32.totalorder %s25, 0
      %p66 = por %p64, %p65
      %s67 = sadd.s32 %s26, %s27
      %s68 = sadd.s32 %s38, %s34
      %s69 = ssub.s32 %s67, %s68
      %p70 = scmp.eq.s32.totalorder %s69, 0
      %s72 = sadd.s32 %s71, 1
      %s73 = scalar_select %p70, %s71, %s72
      %p76 = pneg %p70
      %p77 = scmp.eq.s32.totalorder %s19, 1
      %p78 = por %p76, %p77
      %p79 = scmp.ne.s32.totalorder %s71, %s74
      %p80 = scmp.eq.s32.totalorder %s19, 0
      %p81 = por %p79, %p80
      %p82 = scmp.ne.s32.totalorder %s71, %s74
      %p83 = scmp.eq.s32.totalorder %s24, 1
      %p84 = por %p82, %p83
      %p85 = scmp.ne.s32.totalorder %s74, %s75
      %p86 = scmp.eq.s32.totalorder %s24, 0
      %p87 = por %p85, %p86
      %p88 = scmp.ne.s32.totalorder %s74, %s75
      %p89 = scmp.eq.s32.totalorder %s25, 1
      %p90 = por %p88, %p89
      %p92 = scmp.ne.s32.totalorder %s75, %s91
      %p93 = scmp.eq.s32.totalorder %s25, 0
      %p94 = por %p92, %p93
      %s96 = sadd.s32 %s95, 1
      %p99 = scmp.eq.s32.totalorder %s19, 1
      %p100 = scmp.ne.s32.totalorder %s95, %s97
      %p101 = scmp.eq.s32.totalorder %s19, 0
      %p102 = por %p100, %p101
      %p103 = scmp.ne.s32.totalorder %s95, %s97
      %p104 = scmp.eq.s32.totalorder %s24, 1
      %p105 = por %p103, %p104
      %p106 = scmp.ne.s32.totalorder %s97, %s98
      %p107 = scmp.eq.s32.totalorder %s24, 0
      %p108 = por %p106, %p107
      %p109 = scmp.ne.s32.totalorder %s97, %s98
      %p110 = scmp.eq.s32.totalorder %s25, 1
      %p111 = por %p109, %p110
      %p113 = scmp.ne.s32.totalorder %s98, %s112
      %p114 = scmp.eq.s32.totalorder %s25, 0
      %p115 = por %p113, %p114
      %s117 = sadd.s32 %s116, 1
      %p120 = scmp.eq.s32.totalorder %s19, 1
      %p121 = scmp.ne.s32.totalorder %s116, %s118
      %p122 = scmp.eq.s32.totalorder %s19, 0
      %p123 = por %p121, %p122
      %p124 = scmp.ne.s32.totalorder %s116, %s118
      %p125 = scmp.eq.s32.totalorder %s24, 1
      %p126 = por %p124, %p125
      %p127 = scmp.ne.s32.totalorder %s118, %s119
      %p128 = scmp.eq.s32.totalorder %s24, 0
      %p129 = por %p127, %p128
      %p130 = scmp.ne.s32.totalorder %s118, %s119
      %p131 = scmp.eq.s32.totalorder %s25, 1
      %p132 = por %p130, %p131
      %p134 = scmp.ne.s32.totalorder %s119, %s133
      %p135 = scmp.eq.s32.totalorder %s25, 0
      %p136 = por %p134, %p135
      %s137 = ssub.s32 %s26, %s38
      %p138 = scmp.eq.s32.totalorder %s137, 0
      %s140 = sadd.s32 %s139, 1
      %s141 = scalar_select %p138, %s139, %s140
      %p144 = pneg %p138
      %p145 = scmp.eq.s32.totalorder %s19, 1
      %p146 = por %p144, %p145
      %p147 = scmp.ne.s32.totalorder %s139, %s142
      %p148 = scmp.eq.s32.totalorder %s19, 0
      %p149 = por %p147, %p148
      %p150 = scmp.ne.s32.totalorder %s139, %s142
      %p151 = scmp.eq.s32.totalorder %s24, 1
      %p152 = por %p150, %p151
      %p153 = scmp.ne.s32.totalorder %s142, %s143
      %p154 = scmp.eq.s32.totalorder %s24, 0
      %p155 = por %p153, %p154
      %p156 = scmp.ne.s32.totalorder %s142, %s143
      %p157 = scmp.eq.s32.totalorder %s25, 1
      %p158 = por %p156, %p157
      %p160 = scmp.ne.s32.totalorder %s143, %s159
      %p161 = scmp.eq.s32.totalorder %s25, 0
      %p162 = por %p160, %p161
      %p163 = scmp.le.s32.totalorder 1, %s19
      %p164 = scmp.lt.s32.totalorder %s19, 3
      %p165 = pnand %p163, %p164
      %p166 = pneg %p165
      // Predicated region
      $region9: #{tpu_custom_call.1} parent=5 // pred_check
        _
      $region10: #{tpu_custom_call.1} parent=5 // pred_check_branch
        %168 = sbr.rel (%p165) target = $region12
      $region11: #{tpu_custom_call.1} parent=5 // pred_region
        %s169 = ssub.s32 %s19, 1
        // Predicated region
        $region13: #{tpu_custom_call.1} parent=11 // pred_check
          %p170 = pneg %p108
        $region14: #{tpu_custom_call.1} parent=11 // pred_check_branch
          %172 = sbr.rel (%p170) target = $region16
        $region15: #{tpu_custom_call.1} parent=11 // pred_region
          _
        $region16: #{tpu_custom_call.1} parent=11 // pred_fallthru
          _
        // Predicated region
        $region17: #{tpu_custom_call.1} parent=11 // pred_check
          %p173 = pneg %p129
        $region18: #{tpu_custom_call.1} parent=11 // pred_check_branch
          %175 = sbr.rel (%p173) target = $region20
        $region19: #{tpu_custom_call.1} parent=11 // pred_region
          %177 = vsyncadd [#allocation6], 0
          %s178 = sshll.u32 %s3, 4
          %s179 = int_to_ptr.hbm [resolvable:$true] %s178
          %s180 = sshll.u32 [#allocation7], 4
          %s181 = int_to_ptr.vmem [resolvable:$true] %s180
          %186 = dma.hbm_to_vmem [thread:$0]  %s179, 2048, %s181, [#allocation6], 128, 128, 8
        $region20: #{tpu_custom_call.1} parent=11 // pred_fallthru
          _
      $region12: #{tpu_custom_call.1} parent=5 // pred_fallthru
        _
      %p187 = scmp.lt.s32.totalorder %s19, 2
      // Predicated region
      $region21: #{tpu_custom_call.1} parent=5 // pred_check
        %p188 = pneg %p187
      $region22: #{tpu_custom_call.1} parent=5 // pred_check_branch
        %190 = sbr.rel (%p188) target = $region24
      $region23: #{tpu_custom_call.1} parent=5 // pred_region
        // Predicated region
        $region25: #{tpu_custom_call.1} parent=23 // pred_check
          %p191 = pneg %p53
        $region26: #{tpu_custom_call.1} parent=23 // pred_check_branch
          %193 = sbr.rel (%p191) target = $region28
        $region27: #{tpu_custom_call.1} parent=23 // pred_region
          %s194 = sand.u32 %s43, 1
          %s195 = scalar_lea.sflag [#allocation3], %s194
          %s196 = sand.u32 %s43, 1
          %s197 = smul.addr %s196, 128
          %s198 = scalar_lea.vmem [#allocation2], %s197
          %s199 = sadd.s32 %s26, %s27
          %s200 = smul.u32 16, %s199
          %202 = vsyncadd %s195, 0
          %s203 = smul.addr %s200, 8
          %s204 = scalar_lea.hbm %s0, %s203
          %s205 = sshll.u32 %s204, 4
          %s206 = int_to_ptr.hbm [resolvable:$true] %s205
          %s207 = sshll.u32 %s198, 4
          %s208 = int_to_ptr.vmem [resolvable:$true] %s207
          %213 = dma.hbm_to_vmem [thread:$0]  %s206, 2048, %s208, %s195, 128, 128, 8
        $region28: #{tpu_custom_call.1} parent=23 // pred_fallthru
          _
        // Predicated region
        $region29: #{tpu_custom_call.1} parent=23 // pred_check
          %p214 = pneg %p81
        $region30: #{tpu_custom_call.1} parent=23 // pred_check_branch
          %216 = sbr.rel (%p214) target = $region32
        $region31: #{tpu_custom_call.1} parent=23 // pred_region
          %s217 = sand.u32 %s19, 1
          %s218 = scalar_lea.sflag [#allocation6], %s217
          %s219 = sand.u32 %s71, 1
          %s220 = smul.addr %s219, 32
          %s221 = scalar_lea.vmem [#allocation5], %s220
          %s222 = sadd.s32 %s26, %s27
          %s223 = smul.u32 4, %s222
          %225 = vsyncadd %s218, 0
          %s226 = smul.addr %s223, 8
          %s227 = scalar_lea.hbm %s1, %s226
          %s228 = sshll.u32 %s227, 4
          %s229 = int_to_ptr.hbm [resolvable:$true] %s228
          %s230 = sshll.u32 %s221, 4
          %s231 = int_to_ptr.vmem [resolvable:$true] %s230
          %236 = dma.hbm_to_vmem [thread:$0]  %s229, 512, %s231, %s218, 128, 128, 8
        $region32: #{tpu_custom_call.1} parent=23 // pred_fallthru
          _
      $region24: #{tpu_custom_call.1} parent=5 // pred_fallthru
        _
      %p237 = scmp.le.s32.totalorder 1, %s19
      %p238 = scmp.lt.s32.totalorder %s19, 3
      %p239 = pnand %p237, %p238
      %p240 = pneg %p239
      // Predicated region
      $region33: #{tpu_custom_call.1} parent=5 // pred_check
        _
      $region34: #{tpu_custom_call.1} parent=5 // pred_check_branch
        %242 = sbr.rel (%p239) target = $region36
      $region35: #{tpu_custom_call.1} parent=5 // pred_region
        %s243 = ssub.s32 %s19, 1
        %s244 = sand.u32 %s46, 1
        %s245 = scalar_lea.sflag [#allocation3], %s244
        %s246 = sand.u32 %s46, 1
        %s247 = smul.addr %s246, 128
        %s248 = scalar_lea.vmem [#allocation2], %s247
        // Predicated region
        $region37: #{tpu_custom_call.1} parent=35 // pred_check
          %p249 = pneg %p59
        $region38: #{tpu_custom_call.1} parent=35 // pred_check_branch
          %251 = sbr.rel (%p249) target = $region40
        $region39: #{tpu_custom_call.1} parent=35 // pred_region
          %253 = dma.done %s245, 2048
        $region40: #{tpu_custom_call.1} parent=35 // pred_fallthru
          _
        %s254 = sand.u32 %s24, 1
        %s255 = scalar_lea.sflag [#allocation6], %s254
        %s256 = sand.u32 %s74, 1
        %s257 = smul.addr %s256, 32
        %s258 = scalar_lea.vmem [#allocation5], %s257
        // Predicated region
        $region41: #{tpu_custom_call.1} parent=35 // pred_check
          %p259 = pneg %p87
        $region42: #{tpu_custom_call.1} parent=35 // pred_check_branch
          %261 = sbr.rel (%p259) target = $region44
        $region43: #{tpu_custom_call.1} parent=35 // pred_region
          %263 = dma.done %s255, 512
        $region44: #{tpu_custom_call.1} parent=35 // pred_fallthru
          _
        // Predicated region
        $region45: #{tpu_custom_call.1} parent=35 // pred_check
          %p264 = pneg %p129
        $region46: #{tpu_custom_call.1} parent=35 // pred_check_branch
          %266 = sbr.rel (%p264) target = $region48
        $region47: #{tpu_custom_call.1} parent=35 // pred_region
          %268 = dma.done [#allocation6], 2048
        $region48: #{tpu_custom_call.1} parent=35 // pred_fallthru
          _
        %s269 = sand.u32 %s46, 1
        %s270 = scalar_lea.sflag [#allocation3], %s269
        %s271 = sand.u32 %s46, 1
        %s272 = smul.addr %s271, 128
        %s273 = scalar_lea.vmem [#allocation2], %s272
        %p274 = pneg %p59
        %p275 = pneg %p56
        %s276 = sand.u32 %s24, 1
        %s277 = scalar_lea.sflag [#allocation6], %s276
        %s278 = sand.u32 %s74, 1
        %s279 = smul.addr %s278, 32
        %s280 = scalar_lea.vmem [#allocation5], %s279
        %p281 = pneg %p87
        %p282 = pneg %p84
        %p283 = pneg %p108
        %p284 = pneg %p105
        %p285 = pneg %p129
        %p286 = pneg %p126
        %p287 = pneg %p155
        %p288 = pneg %p152
        %s289 = sand.u32 %s142, 1
        %s290 = scalar_lea.sflag [#allocation4], %s289
        %s291 = sand.u32 %s142, 1
        %s292 = smul.addr %s291, 8
        %s293 = scalar_lea.vmem [#allocation8], %s292
        %s294 = sadd.s32 %s28, %s29
        %s295 = smul.u32 16, %s294
        %s296 = sadd.s32 %s28, %s29
        %s297 = smul.u32 4, %s296
        %p298 = scmp.eq.s32.totalorder %s29, 0
        // Predicated region
        $region49: #{tpu_custom_call.1} parent=35 // pred_check
          %p299 = pneg %p298
        $region50: #{tpu_custom_call.1} parent=35 // pred_check_branch
          %301 = sbr.rel (%p299) target = $region52
        $region51: #{tpu_custom_call.1} parent=35 // pred_region
          %302 = vst [vmem:[%s293] sm:$0xff] 0.0
        $region52: #{tpu_custom_call.1} parent=35 // pred_fallthru
          _
        %v303 = vld [vmem:[%s248] sm:$0xff]
        %v304 = vld [vmem:[%s248 + $0x8] sm:$0xff]
        %v305 = vld [vmem:[%s248 + $0x10] sm:$0xff]
        %v306 = vld [vmem:[%s248 + $0x18] sm:$0xff]
        %v307 = vld [vmem:[%s248 + $0x20] sm:$0xff]
        %v308 = vld [vmem:[%s248 + $0x28] sm:$0xff]
        %v309 = vld [vmem:[%s248 + $0x30] sm:$0xff]
        %v310 = vld [vmem:[%s248 + $0x38] sm:$0xff]
        %v311 = vld [vmem:[%s248 + $0x40] sm:$0xff]
        %v312 = vld [vmem:[%s248 + $0x48] sm:$0xff]
        %v313 = vld [vmem:[%s248 + $0x50] sm:$0xff]
        %v314 = vld [vmem:[%s248 + $0x58] sm:$0xff]
        %v315 = vld [vmem:[%s248 + $0x60] sm:$0xff]
        %v316 = vld [vmem:[%s248 + $0x68] sm:$0xff]
        %v317 = vld [vmem:[%s248 + $0x70] sm:$0xff]
        %v318 = vld [vmem:[%s248 + $0x78] sm:$0xff]
        %319 = vmax.xlane.f32.xlu0 %v303
        %v320 = vpop.xlane.xlu0 %319
        %321 = vmax.xlane.f32.xlu0 %v304
        %v322 = vpop.xlane.xlu0 %321
        %323 = vmax.xlane.f32.xlu0 %v305
        %v324 = vpop.xlane.xlu0 %323
        %325 = vmax.xlane.f32.xlu0 %v306
        %v326 = vpop.xlane.xlu0 %325
        %327 = vmax.xlane.f32.xlu0 %v307
        %v328 = vpop.xlane.xlu0 %327
        %329 = vmax.xlane.f32.xlu0 %v308
        %v330 = vpop.xlane.xlu0 %329
        %331 = vmax.xlane.f32.xlu0 %v309
        %v332 = vpop.xlane.xlu0 %331
        %333 = vmax.xlane.f32.xlu0 %v310
        %v334 = vpop.xlane.xlu0 %333
        %335 = vmax.xlane.f32.xlu0 %v311
        %v336 = vpop.xlane.xlu0 %335
        %337 = vmax.xlane.f32.xlu0 %v312
        %v338 = vpop.xlane.xlu0 %337
        %339 = vmax.xlane.f32.xlu0 %v313
        %v340 = vpop.xlane.xlu0 %339
        %341 = vmax.xlane.f32.xlu0 %v314
        %v342 = vpop.xlane.xlu0 %341
        %343 = vmax.xlane.f32.xlu0 %v315
        %v344 = vpop.xlane.xlu0 %343
        %345 = vmax.xlane.f32.xlu0 %v316
        %v346 = vpop.xlane.xlu0 %345
        %347 = vmax.xlane.f32.xlu0 %v317
        %v348 = vpop.xlane.xlu0 %347
        %349 = vmax.xlane.f32.xlu0 %v318
        %v350 = vpop.xlane.xlu0 %349
        %v351 = vsub.f32 %v303, %v320
        %v352 = vsub.f32 %v304, %v322
        %v353 = vsub.f32 %v305, %v324
        %v354 = vsub.f32 %v306, %v326
        %v355 = vsub.f32 %v307, %v328
        %v356 = vsub.f32 %v308, %v330
        %v357 = vsub.f32 %v309, %v332
        %v358 = vsub.f32 %v310, %v334
        %v359 = vsub.f32 %v311, %v336
        %v360 = vsub.f32 %v312, %v338
        %v361 = vsub.f32 %v313, %v340
        %v362 = vsub.f32 %v314, %v342
        %v363 = vsub.f32 %v315, %v344
        %v364 = vsub.f32 %v316, %v346
        %v365 = vsub.f32 %v317, %v348
        %v366 = vsub.f32 %v318, %v350
        %v367 = vmul.f32 %v351, 1.442695
        %v368 = vpow.pop %v367
        %v369 = vmul.f32 %v352, 1.442695
        %v370 = vpow.pop %v369
        %v371 = vmul.f32 %v353, 1.442695
        %v372 = vpow.pop %v371
        %v373 = vmul.f32 %v354, 1.442695
        %v374 = vpow.pop %v373
        %v375 = vmul.f32 %v355, 1.442695
        %v376 = vpow.pop %v375
        %v377 = vmul.f32 %v356, 1.442695
        %v378 = vpow.pop %v377
        %v379 = vmul.f32 %v357, 1.442695
        %v380 = vpow.pop %v379
        %v381 = vmul.f32 %v358, 1.442695
        %v382 = vpow.pop %v381
        %v383 = vmul.f32 %v359, 1.442695
        %v384 = vpow.pop %v383
        %v385 = vmul.f32 %v360, 1.442695
        %v386 = vpow.pop %v385
        %v387 = vmul.f32 %v361, 1.442695
        %v388 = vpow.pop %v387
        %v389 = vmul.f32 %v362, 1.442695
        %v390 = vpow.pop %v389
        %v391 = vmul.f32 %v363, 1.442695
        %v392 = vpow.pop %v391
        %v393 = vmul.f32 %v364, 1.442695
        %v394 = vpow.pop %v393
        %v395 = vmul.f32 %v365, 1.442695
        %v396 = vpow.pop %v395
        %v397 = vmul.f32 %v366, 1.442695
        %v398 = vpow.pop %v397
        %v399 = vld [vmem:[#allocation7] sm:$0xff]
        %v400 = vld [vmem:[#allocation7 + $0x8] sm:$0xff]
        %v401 = vld [vmem:[#allocation7 + $0x10] sm:$0xff]
        %v402 = vld [vmem:[#allocation7 + $0x18] sm:$0xff]
        %v403 = vld [vmem:[#allocation7 + $0x20] sm:$0xff]
        %v404 = vld [vmem:[#allocation7 + $0x28] sm:$0xff]
        %v405 = vld [vmem:[#allocation7 + $0x30] sm:$0xff]
        %v406 = vld [vmem:[#allocation7 + $0x38] sm:$0xff]
        %v407 = vld [vmem:[#allocation7 + $0x40] sm:$0xff]
        %v408 = vld [vmem:[#allocation7 + $0x48] sm:$0xff]
        %v409 = vld [vmem:[#allocation7 + $0x50] sm:$0xff]
        %v410 = vld [vmem:[#allocation7 + $0x58] sm:$0xff]
        %v411 = vld [vmem:[#allocation7 + $0x60] sm:$0xff]
        %v412 = vld [vmem:[#allocation7 + $0x68] sm:$0xff]
        %v413 = vld [vmem:[#allocation7 + $0x70] sm:$0xff]
        %v414 = vld [vmem:[#allocation7 + $0x78] sm:$0xff]
        %v415 = vand.u32 %v414, 4294901760
        %416 = vmatpush.msra.mxu0 %v415
        %v417 = vand.u32 %v413, 4294901760
        %418 = vmatpush.msra.mxu0 %v417
        %v419 = vand.u32 %v412, 4294901760
        %420 = vmatpush.msra.mxu0 %v419
        %v421 = vand.u32 %v411, 4294901760
        %422 = vmatpush.msra.mxu0 %v421
        %v423 = vand.u32 %v410, 4294901760
        %424 = vmatpush.msra.mxu0 %v423
        %v425 = vand.u32 %v409, 4294901760
        %426 = vmatpush.msra.mxu0 %v425
        %v427 = vand.u32 %v408, 4294901760
        %428 = vmatpush.msra.mxu0 %v427
        %v429 = vand.u32 %v407, 4294901760
        %430 = vmatpush.msra.mxu0 %v429
        %v431 = vand.u32 %v406, 4294901760
        %432 = vmatpush.msra.mxu0 %v431
        %v433 = vand.u32 %v405, 4294901760
        %434 = vmatpush.msra.mxu0 %v433
        %v435 = vand.u32 %v404, 4294901760
        %436 = vmatpush.msra.mxu0 %v435
        %v437 = vand.u32 %v403, 4294901760
        %438 = vmatpush.msra.mxu0 %v437
        %v439 = vand.u32 %v402, 4294901760
        %440 = vmatpush.msra.mxu0 %v439
        %v441 = vand.u32 %v401, 4294901760
        %442 = vmatpush.msra.mxu0 %v441
        %v443 = vand.u32 %v400, 4294901760
        %444 = vmatpush.msra.mxu0 %v443
        %v445 = vand.u32 %v399, 4294901760
        %446 = vmatpush.msra.mxu0 %v445
        %v447 = vand.u32 %v368, 4294901760
        %v448 = vsub.f32 %v368, %v447
        %v449 = vand.u32 %v448, 4294901760
        %v450 = vsub.f32 %v448, %v449
        %v451 = vand.u32 %v450, 4294901760
        %452 = vmatmul.f32.gmra.mxu0 %v451
        %v453 = vpop.f32.mrf.mxu0
        %v454 = vadd.f32 0.0, %v453
        %v455 = vand.u32 %v370, 4294901760
        %v456 = vsub.f32 %v370, %v455
        %v457 = vand.u32 %v456, 4294901760
        %v458 = vsub.f32 %v456, %v457
        %v459 = vand.u32 %v458, 4294901760
        %460 = vmatmul.f32.gmra.mxu0 %v459
        %v461 = vpop.f32.mrf.mxu0
        %v462 = vadd.f32 0.0, %v461
        %v463 = vand.u32 %v372, 4294901760
        %v464 = vsub.f32 %v372, %v463
        %v465 = vand.u32 %v464, 4294901760
        %v466 = vsub.f32 %v464, %v465
        %v467 = vand.u32 %v466, 4294901760
        %468 = vmatmul.f32.gmra.mxu0 %v467
        %v469 = vpop.f32.mrf.mxu0
        %v470 = vadd.f32 0.0, %v469
        %v471 = vand.u32 %v374, 4294901760
        %v472 = vsub.f32 %v374, %v471
        %v473 = vand.u32 %v472, 4294901760
        %v474 = vsub.f32 %v472, %v473
        %v475 = vand.u32 %v474, 4294901760
        %476 = vmatmul.f32.gmra.mxu0 %v475
        %v477 = vpop.f32.mrf.mxu0
        %v478 = vadd.f32 0.0, %v477
        %v479 = vand.u32 %v376, 4294901760
        %v480 = vsub.f32 %v376, %v479
        %v481 = vand.u32 %v480, 4294901760
        %v482 = vsub.f32 %v480, %v481
        %v483 = vand.u32 %v482, 4294901760
        %484 = vmatmul.f32.gmra.mxu0 %v483
        %v485 = vpop.f32.mrf.mxu0
        %v486 = vadd.f32 0.0, %v485
        %v487 = vand.u32 %v378, 4294901760
        %v488 = vsub.f32 %v378, %v487
        %v489 = vand.u32 %v488, 4294901760
        %v490 = vsub.f32 %v488, %v489
        %v491 = vand.u32 %v490, 4294901760
        %492 = vmatmul.f32.gmra.mxu0 %v491
        %v493 = vpop.f32.mrf.mxu0
        %v494 = vadd.f32 0.0, %v493
        %v495 = vand.u32 %v380, 4294901760
        %v496 = vsub.f32 %v380, %v495
        %v497 = vand.u32 %v496, 4294901760
        %v498 = vsub.f32 %v496, %v497
        %v499 = vand.u32 %v498, 4294901760
        %500 = vmatmul.f32.gmra.mxu0 %v499
        %v501 = vpop.f32.mrf.mxu0
        %v502 = vadd.f32 0.0, %v501
        %v503 = vand.u32 %v382, 4294901760
        %v504 = vsub.f32 %v382, %v503
        %v505 = vand.u32 %v504, 4294901760
        %v506 = vsub.f32 %v504, %v505
        %v507 = vand.u32 %v506, 4294901760
        %508 = vmatmul.f32.gmra.mxu0 %v507
        %v509 = vpop.f32.mrf.mxu0
        %v510 = vadd.f32 0.0, %v509
        %v511 = vand.u32 %v384, 4294901760
        %v512 = vsub.f32 %v384, %v511
        %v513 = vand.u32 %v512, 4294901760
        %v514 = vsub.f32 %v512, %v513
        %v515 = vand.u32 %v514, 4294901760
        %516 = vmatmul.f32.gmra.mxu0 %v515
        %v517 = vpop.f32.mrf.mxu0
        %v518 = vadd.f32 0.0, %v517
        %v519 = vand.u32 %v386, 4294901760
        %v520 = vsub.f32 %v386, %v519
        %v521 = vand.u32 %v520, 4294901760
        %v522 = vsub.f32 %v520, %v521
        %v523 = vand.u32 %v522, 4294901760
        %524 = vmatmul.f32.gmra.mxu0 %v523
        %v525 = vpop.f32.mrf.mxu0
        %v526 = vadd.f32 0.0, %v525
        %v527 = vand.u32 %v388, 4294901760
        %v528 = vsub.f32 %v388, %v527
        %v529 = vand.u32 %v528, 4294901760
        %v530 = vsub.f32 %v528, %v529
        %v531 = vand.u32 %v530, 4294901760
        %532 = vmatmul.f32.gmra.mxu0 %v531
        %v533 = vpop.f32.mrf.mxu0
        %v534 = vadd.f32 0.0, %v533
        %v535 = vand.u32 %v390, 4294901760
        %v536 = vsub.f32 %v390, %v535
        %v537 = vand.u32 %v536, 4294901760
        %v538 = vsub.f32 %v536, %v537
        %v539 = vand.u32 %v538, 4294901760
        %540 = vmatmul.f32.gmra.mxu0 %v539
        %v541 = vpop.f32.mrf.mxu0
        %v542 = vadd.f32 0.0, %v541
        %v543 = vand.u32 %v392, 4294901760
        %v544 = vsub.f32 %v392, %v543
        %v545 = vand.u32 %v544, 4294901760
        %v546 = vsub.f32 %v544, %v545
        %v547 = vand.u32 %v546, 4294901760
        %548 = vmatmul.f32.gmra.mxu0 %v547
        %v549 = vpop.f32.mrf.mxu0
        %v550 = vadd.f32 0.0, %v549
        %v551 = vand.u32 %v394, 4294901760
        %v552 = vsub.f32 %v394, %v551
        %v553 = vand.u32 %v552, 4294901760
        %v554 = vsub.f32 %v552, %v553
        %v555 = vand.u32 %v554, 4294901760
        %556 = vmatmul.f32.gmra.mxu0 %v555
        %v557 = vpop.f32.mrf.mxu0
        %v558 = vadd.f32 0.0, %v557
        %v559 = vand.u32 %v396, 4294901760
        %v560 = vsub.f32 %v396, %v559
        %v561 = vand.u32 %v560, 4294901760
        %v562 = vsub.f32 %v560, %v561
        %v563 = vand.u32 %v562, 4294901760
        %564 = vmatmul.f32.gmra.mxu0 %v563
        %v565 = vpop.f32.mrf.mxu0
        %v566 = vadd.f32 0.0, %v565
        %v567 = vand.u32 %v398, 4294901760
        %v568 = vsub.f32 %v398, %v567
        %v569 = vand.u32 %v568, 4294901760
        %v570 = vsub.f32 %v568, %v569
        %v571 = vand.u32 %v570, 4294901760
        %572 = vmatmul.f32.gmra.mxu0 %v571
        %v573 = vpop.f32.mrf.mxu0
        %v574 = vadd.f32 0.0, %v573
        %575 = vdwg.mxu0
        %v576 = vand.u32 %v414, 4294901760
        %v577 = vsub.f32 %v414, %v576
        %v578 = vand.u32 %v577, 4294901760
        %v579 = vsub.f32 %v577, %v578
        %v580 = vand.u32 %v579, 4294901760
        %581 = vmatpush.msra.mxu0 %v580
        %v582 = vand.u32 %v413, 4294901760
        %v583 = vsub.f32 %v413, %v582
        %v584 = vand.u32 %v583, 4294901760
        %v585 = vsub.f32 %v583, %v584
        %v586 = vand.u32 %v585, 4294901760
        %587 = vmatpush.msra.mxu0 %v586
        %v588 = vand.u32 %v412, 4294901760
        %v589 = vsub.f32 %v412, %v588
        %v590 = vand.u32 %v589, 4294901760
        %v591 = vsub.f32 %v589, %v590
        %v592 = vand.u32 %v591, 4294901760
        %593 = vmatpush.msra.mxu0 %v592
        %v594 = vand.u32 %v411, 4294901760
        %v595 = vsub.f32 %v411, %v594
        %v596 = vand.u32 %v595, 4294901760
        %v597 = vsub.f32 %v595, %v596
        %v598 = vand.u32 %v597, 4294901760
        %599 = vmatpush.msra.mxu0 %v598
        %v600 = vand.u32 %v410, 4294901760
        %v601 = vsub.f32 %v410, %v600
        %v602 = vand.u32 %v601, 4294901760
        %v603 = vsub.f32 %v601, %v602
        %v604 = vand.u32 %v603, 4294901760
        %605 = vmatpush.msra.mxu0 %v604
        %v606 = vand.u32 %v409, 4294901760
        %v607 = vsub.f32 %v409, %v606
        %v608 = vand.u32 %v607, 4294901760
        %v609 = vsub.f32 %v607, %v608
        %v610 = vand.u32 %v609, 4294901760
        %611 = vmatpush.msra.mxu0 %v610
        %v612 = vand.u32 %v408, 4294901760
        %v613 = vsub.f32 %v408, %v612
        %v614 = vand.u32 %v613, 4294901760
        %v615 = vsub.f32 %v613, %v614
        %v616 = vand.u32 %v615, 4294901760
        %617 = vmatpush.msra.mxu0 %v616
        %v618 = vand.u32 %v407, 4294901760
        %v619 = vsub.f32 %v407, %v618
        %v620 = vand.u32 %v619, 4294901760
        %v621 = vsub.f32 %v619, %v620
        %v622 = vand.u32 %v621, 4294901760
        %623 = vmatpush.msra.mxu0 %v622
        %v624 = vand.u32 %v406, 4294901760
        %v625 = vsub.f32 %v406, %v624
        %v626 = vand.u32 %v625, 4294901760
        %v627 = vsub.f32 %v625, %v626
        %v628 = vand.u32 %v627, 4294901760
        %629 = vmatpush.msra.mxu0 %v628
        %v630 = vand.u32 %v405, 4294901760
        %v631 = vsub.f32 %v405, %v630
        %v632 = vand.u32 %v631, 4294901760
        %v633 = vsub.f32 %v631, %v632
        %v634 = vand.u32 %v633, 4294901760
        %635 = vmatpush.msra.mxu0 %v634
        %v636 = vand.u32 %v404, 4294901760
        %v637 = vsub.f32 %v404, %v636
        %v638 = vand.u32 %v637, 4294901760
        %v639 = vsub.f32 %v637, %v638
        %v640 = vand.u32 %v639, 4294901760
        %641 = vmatpush.msra.mxu0 %v640
        %v642 = vand.u32 %v403, 4294901760
        %v643 = vsub.f32 %v403, %v642
        %v644 = vand.u32 %v643, 4294901760
        %v645 = vsub.f32 %v643, %v644
        %v646 = vand.u32 %v645, 4294901760
        %647 = vmatpush.msra.mxu0 %v646
        %v648 = vand.u32 %v402, 4294901760
        %v649 = vsub.f32 %v402, %v648
        %v650 = vand.u32 %v649, 4294901760
        %v651 = vsub.f32 %v649, %v650
        %v652 = vand.u32 %v651, 4294901760
        %653 = vmatpush.msra.mxu0 %v652
        %v654 = vand.u32 %v401, 4294901760
        %v655 = vsub.f32 %v401, %v654
        %v656 = vand.u32 %v655, 4294901760
        %v657 = vsub.f32 %v655, %v656
        %v658 = vand.u32 %v657, 4294901760
        %659 = vmatpush.msra.mxu0 %v658
        %v660 = vand.u32 %v400, 4294901760
        %v661 = vsub.f32 %v400, %v660
        %v662 = vand.u32 %v661, 4294901760
        %v663 = vsub.f32 %v661, %v662
        %v664 = vand.u32 %v663, 4294901760
        %665 = vmatpush.msra.mxu0 %v664
        %v666 = vand.u32 %v399, 4294901760
        %v667 = vsub.f32 %v399, %v666
        %v668 = vand.u32 %v667, 4294901760
        %v669 = vsub.f32 %v667, %v668
        %v670 = vand.u32 %v669, 4294901760
        %671 = vmatpush.msra.mxu0 %v670
        %v672 = vand.u32 %v368, 4294901760
        %673 = vmatmul.f32.gmra.mxu0 %v672
        %v674 = vpop.f32.mrf.mxu0
        %v675 = vadd.f32 %v454, %v674
        %v676 = vand.u32 %v370, 4294901760
        %677 = vmatmul.f32.gmra.mxu0 %v676
        %v678 = vpop.f32.mrf.mxu0
        %v679 = vadd.f32 %v462, %v678
        %v680 = vand.u32 %v372, 4294901760
        %681 = vmatmul.f32.gmra.mxu0 %v680
        %v682 = vpop.f32.mrf.mxu0
        %v683 = vadd.f32 %v470, %v682
        %v684 = vand.u32 %v374, 4294901760
        %685 = vmatmul.f32.gmra.mxu0 %v684
        %v686 = vpop.f32.mrf.mxu0
        %v687 = vadd.f32 %v478, %v686
        %v688 = vand.u32 %v376, 4294901760
        %689 = vmatmul.f32.gmra.mxu0 %v688
        %v690 = vpop.f32.mrf.mxu0
        %v691 = vadd.f32 %v486, %v690
        %v692 = vand.u32 %v378, 4294901760
        %693 = vmatmul.f32.gmra.mxu0 %v692
        %v694 = vpop.f32.mrf.mxu0
        %v695 = vadd.f32 %v494, %v694
        %v696 = vand.u32 %v380, 4294901760
        %697 = vmatmul.f32.gmra.mxu0 %v696
        %v698 = vpop.f32.mrf.mxu0
        %v699 = vadd.f32 %v502, %v698
        %v700 = vand.u32 %v382, 4294901760
        %701 = vmatmul.f32.gmra.mxu0 %v700
        %v702 = vpop.f32.mrf.mxu0
        %v703 = vadd.f32 %v510, %v702
        %v704 = vand.u32 %v384, 4294901760
        %705 = vmatmul.f32.gmra.mxu0 %v704
        %v706 = vpop.f32.mrf.mxu0
        %v707 = vadd.f32 %v518, %v706
        %v708 = vand.u32 %v386, 4294901760
        %709 = vmatmul.f32.gmra.mxu0 %v708
        %v710 = vpop.f32.mrf.mxu0
        %v711 = vadd.f32 %v526, %v710
        %v712 = vand.u32 %v388, 4294901760
        %713 = vmatmul.f32.gmra.mxu0 %v712
        %v714 = vpop.f32.mrf.mxu0
        %v715 = vadd.f32 %v534, %v714
        %v716 = vand.u32 %v390, 4294901760
        %717 = vmatmul.f32.gmra.mxu0 %v716
        %v718 = vpop.f32.mrf.mxu0
        %v719 = vadd.f32 %v542, %v718
        %v720 = vand.u32 %v392, 4294901760
        %721 = vmatmul.f32.gmra.mxu0 %v720
        %v722 = vpop.f32.mrf.mxu0
        %v723 = vadd.f32 %v550, %v722
        %v724 = vand.u32 %v394, 4294901760
        %725 = vmatmul.f32.gmra.mxu0 %v724
        %v726 = vpop.f32.mrf.mxu0
        %v727 = vadd.f32 %v558, %v726
        %v728 = vand.u32 %v396, 4294901760
        %729 = vmatmul.f32.gmra.mxu0 %v728
        %v730 = vpop.f32.mrf.mxu0
        %v731 = vadd.f32 %v566, %v730
        %v732 = vand.u32 %v398, 4294901760
        %733 = vmatmul.f32.gmra.mxu0 %v732
        %v734 = vpop.f32.mrf.mxu0
        %v735 = vadd.f32 %v574, %v734
        %736 = vdwg.mxu0
        %v737 = vand.u32 %v414, 4294901760
        %v738 = vsub.f32 %v414, %v737
        %739 = vmatpush.msra.mxu0 %v738
        %v740 = vand.u32 %v413, 4294901760
        %v741 = vsub.f32 %v413, %v740
        %742 = vmatpush.msra.mxu0 %v741
        %v743 = vand.u32 %v412, 4294901760
        %v744 = vsub.f32 %v412, %v743
        %745 = vmatpush.msra.mxu0 %v744
        %v746 = vand.u32 %v411, 4294901760
        %v747 = vsub.f32 %v411, %v746
        %748 = vmatpush.msra.mxu0 %v747
        %v749 = vand.u32 %v410, 4294901760
        %v750 = vsub.f32 %v410, %v749
        %751 = vmatpush.msra.mxu0 %v750
        %v752 = vand.u32 %v409, 4294901760
        %v753 = vsub.f32 %v409, %v752
        %754 = vmatpush.msra.mxu0 %v753
        %v755 = vand.u32 %v408, 4294901760
        %v756 = vsub.f32 %v408, %v755
        %757 = vmatpush.msra.mxu0 %v756
        %v758 = vand.u32 %v407, 4294901760
        %v759 = vsub.f32 %v407, %v758
        %760 = vmatpush.msra.mxu0 %v759
        %v761 = vand.u32 %v406, 4294901760
        %v762 = vsub.f32 %v406, %v761
        %763 = vmatpush.msra.mxu0 %v762
        %v764 = vand.u32 %v405, 4294901760
        %v765 = vsub.f32 %v405, %v764
        %766 = vmatpush.msra.mxu0 %v765
        %v767 = vand.u32 %v404, 4294901760
        %v768 = vsub.f32 %v404, %v767
        %769 = vmatpush.msra.mxu0 %v768
        %v770 = vand.u32 %v403, 4294901760
        %v771 = vsub.f32 %v403, %v770
        %772 = vmatpush.msra.mxu0 %v771
        %v773 = vand.u32 %v402, 4294901760
        %v774 = vsub.f32 %v402, %v773
        %775 = vmatpush.msra.mxu0 %v774
        %v776 = vand.u32 %v401, 4294901760
        %v777 = vsub.f32 %v401, %v776
        %778 = vmatpush.msra.mxu0 %v777
        %v779 = vand.u32 %v400, 4294901760
        %v780 = vsub.f32 %v400, %v779
        %781 = vmatpush.msra.mxu0 %v780
        %v782 = vand.u32 %v399, 4294901760
        %v783 = vsub.f32 %v399, %v782
        %784 = vmatpush.msra.mxu0 %v783
        %v785 = vand.u32 %v368, 4294901760
        %v786 = vsub.f32 %v368, %v785
        %787 = vmatmul.f32.gmra.mxu0 %v786
        %v788 = vpop.f32.mrf.mxu0
        %v789 = vadd.f32 %v675, %v788
        %v790 = vand.u32 %v370, 4294901760
        %v791 = vsub.f32 %v370, %v790
        %792 = vmatmul.f32.gmra.mxu0 %v791
        %v793 = vpop.f32.mrf.mxu0
        %v794 = vadd.f32 %v679, %v793
        %v795 = vand.u32 %v372, 4294901760
        %v796 = vsub.f32 %v372, %v795
        %797 = vmatmul.f32.gmra.mxu0 %v796
        %v798 = vpop.f32.mrf.mxu0
        %v799 = vadd.f32 %v683, %v798
        %v800 = vand.u32 %v374, 4294901760
        %v801 = vsub.f32 %v374, %v800
        %802 = vmatmul.f32.gmra.mxu0 %v801
        %v803 = vpop.f32.mrf.mxu0
        %v804 = vadd.f32 %v687, %v803
        %v805 = vand.u32 %v376, 4294901760
        %v806 = vsub.f32 %v376, %v805
        %807 = vmatmul.f32.gmra.mxu0 %v806
        %v808 = vpop.f32.mrf.mxu0
        %v809 = vadd.f32 %v691, %v808
        %v810 = vand.u32 %v378, 4294901760
        %v811 = vsub.f32 %v378, %v810
        %812 = vmatmul.f32.gmra.mxu0 %v811
        %v813 = vpop.f32.mrf.mxu0
        %v814 = vadd.f32 %v695, %v813
        %v815 = vand.u32 %v380, 4294901760
        %v816 = vsub.f32 %v380, %v815
        %817 = vmatmul.f32.gmra.mxu0 %v816
        %v818 = vpop.f32.mrf.mxu0
        %v819 = vadd.f32 %v699, %v818
        %v820 = vand.u32 %v382, 4294901760
        %v821 = vsub.f32 %v382, %v820
        %822 = vmatmul.f32.gmra.mxu0 %v821
        %v823 = vpop.f32.mrf.mxu0
        %v824 = vadd.f32 %v703, %v823
        %v825 = vand.u32 %v384, 4294901760
        %v826 = vsub.f32 %v384, %v825
        %827 = vmatmul.f32.gmra.mxu0 %v826
        %v828 = vpop.f32.mrf.mxu0
        %v829 = vadd.f32 %v707, %v828
        %v830 = vand.u32 %v386, 4294901760
        %v831 = vsub.f32 %v386, %v830
        %832 = vmatmul.f32.gmra.mxu0 %v831
        %v833 = vpop.f32.mrf.mxu0
        %v834 = vadd.f32 %v711, %v833
        %v835 = vand.u32 %v388, 4294901760
        %v836 = vsub.f32 %v388, %v835
        %837 = vmatmul.f32.gmra.mxu0 %v836
        %v838 = vpop.f32.mrf.mxu0
        %v839 = vadd.f32 %v715, %v838
        %v840 = vand.u32 %v390, 4294901760
        %v841 = vsub.f32 %v390, %v840
        %842 = vmatmul.f32.gmra.mxu0 %v841
        %v843 = vpop.f32.mrf.mxu0
        %v844 = vadd.f32 %v719, %v843
        %v845 = vand.u32 %v392, 4294901760
        %v846 = vsub.f32 %v392, %v845
        %847 = vmatmul.f32.gmra.mxu0 %v846
        %v848 = vpop.f32.mrf.mxu0
        %v849 = vadd.f32 %v723, %v848
        %v850 = vand.u32 %v394, 4294901760
        %v851 = vsub.f32 %v394, %v850
        %852 = vmatmul.f32.gmra.mxu0 %v851
        %v853 = vpop.f32.mrf.mxu0
        %v854 = vadd.f32 %v727, %v853
        %v855 = vand.u32 %v396, 4294901760
        %v856 = vsub.f32 %v396, %v855
        %857 = vmatmul.f32.gmra.mxu0 %v856
        %v858 = vpop.f32.mrf.mxu0
        %v859 = vadd.f32 %v731, %v858
        %v860 = vand.u32 %v398, 4294901760
        %v861 = vsub.f32 %v398, %v860
        %862 = vmatmul.f32.gmra.mxu0 %v861
        %v863 = vpop.f32.mrf.mxu0
        %v864 = vadd.f32 %v735, %v863
        %865 = vdwg.mxu0
        %v866 = vand.u32 %v414, 4294901760
        %867 = vmatpush.msra.mxu0 %v866
        %v868 = vand.u32 %v413, 4294901760
        %869 = vmatpush.msra.mxu0 %v868
        %v870 = vand.u32 %v412, 4294901760
        %871 = vmatpush.msra.mxu0 %v870
        %v872 = vand.u32 %v411, 4294901760
        %873 = vmatpush.msra.mxu0 %v872
        %v874 = vand.u32 %v410, 4294901760
        %875 = vmatpush.msra.mxu0 %v874
        %v876 = vand.u32 %v409, 4294901760
        %877 = vmatpush.msra.mxu0 %v876
        %v878 = vand.u32 %v408, 4294901760
        %879 = vmatpush.msra.mxu0 %v878
        %v880 = vand.u32 %v407, 4294901760
        %881 = vmatpush.msra.mxu0 %v880
        %v882 = vand.u32 %v406, 4294901760
        %883 = vmatpush.msra.mxu0 %v882
        %v884 = vand.u32 %v405, 4294901760
        %885 = vmatpush.msra.mxu0 %v884
        %v886 = vand.u32 %v404, 4294901760
        %887 = vmatpush.msra.mxu0 %v886
        %v888 = vand.u32 %v403, 4294901760
        %889 = vmatpush.msra.mxu0 %v888
        %v890 = vand.u32 %v402, 4294901760
        %891 = vmatpush.msra.mxu0 %v890
        %v892 = vand.u32 %v401, 4294901760
        %893 = vmatpush.msra.mxu0 %v892
        %v894 = vand.u32 %v400, 4294901760
        %895 = vmatpush.msra.mxu0 %v894
        %v896 = vand.u32 %v399, 4294901760
        %897 = vmatpush.msra.mxu0 %v896
        %v898 = vand.u32 %v368, 4294901760
        %v899 = vsub.f32 %v368, %v898
        %v900 = vand.u32 %v899, 4294901760
        %901 = vmatmul.f32.gmra.mxu0 %v900
        %v902 = vpop.f32.mrf.mxu0
        %v903 = vadd.f32 %v789, %v902
        %v904 = vand.u32 %v370, 4294901760
        %v905 = vsub.f32 %v370, %v904
        %v906 = vand.u32 %v905, 4294901760
        %907 = vmatmul.f32.gmra.mxu0 %v906
        %v908 = vpop.f32.mrf.mxu0
        %v909 = vadd.f32 %v794, %v908
        %v910 = vand.u32 %v372, 4294901760
        %v911 = vsub.f32 %v372, %v910
        %v912 = vand.u32 %v911, 4294901760
        %913 = vmatmul.f32.gmra.mxu0 %v912
        %v914 = vpop.f32.mrf.mxu0
        %v915 = vadd.f32 %v799, %v914
        %v916 = vand.u32 %v374, 4294901760
        %v917 = vsub.f32 %v374, %v916
        %v918 = vand.u32 %v917, 4294901760
        %919 = vmatmul.f32.gmra.mxu0 %v918
        %v920 = vpop.f32.mrf.mxu0
        %v921 = vadd.f32 %v804, %v920
        %v922 = vand.u32 %v376, 4294901760
        %v923 = vsub.f32 %v376, %v922
        %v924 = vand.u32 %v923, 4294901760
        %925 = vmatmul.f32.gmra.mxu0 %v924
        %v926 = vpop.f32.mrf.mxu0
        %v927 = vadd.f32 %v809, %v926
        %v928 = vand.u32 %v378, 4294901760
        %v929 = vsub.f32 %v378, %v928
        %v930 = vand.u32 %v929, 4294901760
        %931 = vmatmul.f32.gmra.mxu0 %v930
        %v932 = vpop.f32.mrf.mxu0
        %v933 = vadd.f32 %v814, %v932
        %v934 = vand.u32 %v380, 4294901760
        %v935 = vsub.f32 %v380, %v934
        %v936 = vand.u32 %v935, 4294901760
        %937 = vmatmul.f32.gmra.mxu0 %v936
        %v938 = vpop.f32.mrf.mxu0
        %v939 = vadd.f32 %v819, %v938
        %v940 = vand.u32 %v382, 4294901760
        %v941 = vsub.f32 %v382, %v940
        %v942 = vand.u32 %v941, 4294901760
        %943 = vmatmul.f32.gmra.mxu0 %v942
        %v944 = vpop.f32.mrf.mxu0
        %v945 = vadd.f32 %v824, %v944
        %v946 = vand.u32 %v384, 4294901760
        %v947 = vsub.f32 %v384, %v946
        %v948 = vand.u32 %v947, 4294901760
        %949 = vmatmul.f32.gmra.mxu0 %v948
        %v950 = vpop.f32.mrf.mxu0
        %v951 = vadd.f32 %v829, %v950
        %v952 = vand.u32 %v386, 4294901760
        %v953 = vsub.f32 %v386, %v952
        %v954 = vand.u32 %v953, 4294901760
        %955 = vmatmul.f32.gmra.mxu0 %v954
        %v956 = vpop.f32.mrf.mxu0
        %v957 = vadd.f32 %v834, %v956
        %v958 = vand.u32 %v388, 4294901760
        %v959 = vsub.f32 %v388, %v958
        %v960 = vand.u32 %v959, 4294901760
        %961 = vmatmul.f32.gmra.mxu0 %v960
        %v962 = vpop.f32.mrf.mxu0
        %v963 = vadd.f32 %v839, %v962
        %v964 = vand.u32 %v390, 4294901760
        %v965 = vsub.f32 %v390, %v964
        %v966 = vand.u32 %v965, 4294901760
        %967 = vmatmul.f32.gmra.mxu0 %v966
        %v968 = vpop.f32.mrf.mxu0
        %v969 = vadd.f32 %v844, %v968
        %v970 = vand.u32 %v392, 4294901760
        %v971 = vsub.f32 %v392, %v970
        %v972 = vand.u32 %v971, 4294901760
        %973 = vmatmul.f32.gmra.mxu0 %v972
        %v974 = vpop.f32.mrf.mxu0
        %v975 = vadd.f32 %v849, %v974
        %v976 = vand.u32 %v394, 4294901760
        %v977 = vsub.f32 %v394, %v976
        %v978 = vand.u32 %v977, 4294901760
        %979 = vmatmul.f32.gmra.mxu0 %v978
        %v980 = vpop.f32.mrf.mxu0
        %v981 = vadd.f32 %v854, %v980
        %v982 = vand.u32 %v396, 4294901760
        %v983 = vsub.f32 %v396, %v982
        %v984 = vand.u32 %v983, 4294901760
        %985 = vmatmul.f32.gmra.mxu0 %v984
        %v986 = vpop.f32.mrf.mxu0
        %v987 = vadd.f32 %v859, %v986
        %v988 = vand.u32 %v398, 4294901760
        %v989 = vsub.f32 %v398, %v988
        %v990 = vand.u32 %v989, 4294901760
        %991 = vmatmul.f32.gmra.mxu0 %v990
        %v992 = vpop.f32.mrf.mxu0
        %v993 = vadd.f32 %v864, %v992
        %994 = vdwg.mxu0
        %v995 = vand.u32 %v414, 4294901760
        %v996 = vsub.f32 %v414, %v995
        %v997 = vand.u32 %v996, 4294901760
        %998 = vmatpush.msra.mxu0 %v997
        %v999 = vand.u32 %v413, 4294901760
        %v1000 = vsub.f32 %v413, %v999
        %v1001 = vand.u32 %v1000, 4294901760
        %1002 = vmatpush.msra.mxu0 %v1001
        %v1003 = vand.u32 %v412, 4294901760
        %v1004 = vsub.f32 %v412, %v1003
        %v1005 = vand.u32 %v1004, 4294901760
        %1006 = vmatpush.msra.mxu0 %v1005
        %v1007 = vand.u32 %v411, 4294901760
        %v1008 = vsub.f32 %v411, %v1007
        %v1009 = vand.u32 %v1008, 4294901760
        %1010 = vmatpush.msra.mxu0 %v1009
        %v1011 = vand.u32 %v410, 4294901760
        %v1012 = vsub.f32 %v410, %v1011
        %v1013 = vand.u32 %v1012, 4294901760
        %1014 = vmatpush.msra.mxu0 %v1013
        %v1015 = vand.u32 %v409, 4294901760
        %v1016 = vsub.f32 %v409, %v1015
        %v1017 = vand.u32 %v1016, 4294901760
        %1018 = vmatpush.msra.mxu0 %v1017
        %v1019 = vand.u32 %v408, 4294901760
        %v1020 = vsub.f32 %v408, %v1019
        %v1021 = vand.u32 %v1020, 4294901760
        %1022 = vmatpush.msra.mxu0 %v1021
        %v1023 = vand.u32 %v407, 4294901760
        %v1024 = vsub.f32 %v407, %v1023
        %v1025 = vand.u32 %v1024, 4294901760
        %1026 = vmatpush.msra.mxu0 %v1025
        %v1027 = vand.u32 %v406, 4294901760
        %v1028 = vsub.f32 %v406, %v1027
        %v1029 = vand.u32 %v1028, 4294901760
        %1030 = vmatpush.msra.mxu0 %v1029
        %v1031 = vand.u32 %v405, 4294901760
        %v1032 = vsub.f32 %v405, %v1031
        %v1033 = vand.u32 %v1032, 4294901760
        %1034 = vmatpush.msra.mxu0 %v1033
        %v1035 = vand.u32 %v404, 4294901760
        %v1036 = vsub.f32 %v404, %v1035
        %v1037 = vand.u32 %v1036, 4294901760
        %1038 = vmatpush.msra.mxu0 %v1037
        %v1039 = vand.u32 %v403, 4294901760
        %v1040 = vsub.f32 %v403, %v1039
        %v1041 = vand.u32 %v1040, 4294901760
        %1042 = vmatpush.msra.mxu0 %v1041
        %v1043 = vand.u32 %v402, 4294901760
        %v1044 = vsub.f32 %v402, %v1043
        %v1045 = vand.u32 %v1044, 4294901760
        %1046 = vmatpush.msra.mxu0 %v1045
        %v1047 = vand.u32 %v401, 4294901760
        %v1048 = vsub.f32 %v401, %v1047
        %v1049 = vand.u32 %v1048, 4294901760
        %1050 = vmatpush.msra.mxu0 %v1049
        %v1051 = vand.u32 %v400, 4294901760
        %v1052 = vsub.f32 %v400, %v1051
        %v1053 = vand.u32 %v1052, 4294901760
        %1054 = vmatpush.msra.mxu0 %v1053
        %v1055 = vand.u32 %v399, 4294901760
        %v1056 = vsub.f32 %v399, %v1055
        %v1057 = vand.u32 %v1056, 4294901760
        %1058 = vmatpush.msra.mxu0 %v1057
        %v1059 = vand.u32 %v368, 4294901760
        %1060 = vmatmul.f32.gmra.mxu0 %v1059
        %v1061 = vpop.f32.mrf.mxu0
        %v1062 = vadd.f32 %v903, %v1061
        %v1063 = vand.u32 %v370, 4294901760
        %1064 = vmatmul.f32.gmra.mxu0 %v1063
        %v1065 = vpop.f32.mrf.mxu0
        %v1066 = vadd.f32 %v909, %v1065
        %v1067 = vand.u32 %v372, 4294901760
        %1068 = vmatmul.f32.gmra.mxu0 %v1067
        %v1069 = vpop.f32.mrf.mxu0
        %v1070 = vadd.f32 %v915, %v1069
        %v1071 = vand.u32 %v374, 4294901760
        %1072 = vmatmul.f32.gmra.mxu0 %v1071
        %v1073 = vpop.f32.mrf.mxu0
        %v1074 = vadd.f32 %v921, %v1073
        %v1075 = vand.u32 %v376, 4294901760
        %1076 = vmatmul.f32.gmra.mxu0 %v1075
        %v1077 = vpop.f32.mrf.mxu0
        %v1078 = vadd.f32 %v927, %v1077
        %v1079 = vand.u32 %v378, 4294901760
        %1080 = vmatmul.f32.gmra.mxu0 %v1079
        %v1081 = vpop.f32.mrf.mxu0
        %v1082 = vadd.f32 %v933, %v1081
        %v1083 = vand.u32 %v380, 4294901760
        %1084 = vmatmul.f32.gmra.mxu0 %v1083
        %v1085 = vpop.f32.mrf.mxu0
        %v1086 = vadd.f32 %v939, %v1085
        %v1087 = vand.u32 %v382, 4294901760
        %1088 = vmatmul.f32.gmra.mxu0 %v1087
        %v1089 = vpop.f32.mrf.mxu0
        %v1090 = vadd.f32 %v945, %v1089
        %v1091 = vand.u32 %v384, 4294901760
        %1092 = vmatmul.f32.gmra.mxu0 %v1091
        %v1093 = vpop.f32.mrf.mxu0
        %v1094 = vadd.f32 %v951, %v1093
        %v1095 = vand.u32 %v386, 4294901760
        %1096 = vmatmul.f32.gmra.mxu0 %v1095
        %v1097 = vpop.f32.mrf.mxu0
        %v1098 = vadd.f32 %v957, %v1097
        %v1099 = vand.u32 %v388, 4294901760
        %1100 = vmatmul.f32.gmra.mxu0 %v1099
        %v1101 = vpop.f32.mrf.mxu0
        %v1102 = vadd.f32 %v963, %v1101
        %v1103 = vand.u32 %v390, 4294901760
        %1104 = vmatmul.f32.gmra.mxu0 %v1103
        %v1105 = vpop.f32.mrf.mxu0
        %v1106 = vadd.f32 %v969, %v1105
        %v1107 = vand.u32 %v392, 4294901760
        %1108 = vmatmul.f32.gmra.mxu0 %v1107
        %v1109 = vpop.f32.mrf.mxu0
        %v1110 = vadd.f32 %v975, %v1109
        %v1111 = vand.u32 %v394, 4294901760
        %1112 = vmatmul.f32.gmra.mxu0 %v1111
        %v1113 = vpop.f32.mrf.mxu0
        %v1114 = vadd.f32 %v981, %v1113
        %v1115 = vand.u32 %v396, 4294901760
        %1116 = vmatmul.f32.gmra.mxu0 %v1115
        %v1117 = vpop.f32.mrf.mxu0
        %v1118 = vadd.f32 %v987, %v1117
        %v1119 = vand.u32 %v398, 4294901760
        %1120 = vmatmul.f32.gmra.mxu0 %v1119
        %v1121 = vpop.f32.mrf.mxu0
        %v1122 = vadd.f32 %v993, %v1121
        %1123 = vdwg.mxu0
        %v1124 = vand.u32 %v414, 4294901760
        %1125 = vmatpush.msra.mxu0 %v1124
        %v1126 = vand.u32 %v413, 4294901760
        %1127 = vmatpush.msra.mxu0 %v1126
        %v1128 = vand.u32 %v412, 4294901760
        %1129 = vmatpush.msra.mxu0 %v1128
        %v1130 = vand.u32 %v411, 4294901760
        %1131 = vmatpush.msra.mxu0 %v1130
        %v1132 = vand.u32 %v410, 4294901760
        %1133 = vmatpush.msra.mxu0 %v1132
        %v1134 = vand.u32 %v409, 4294901760
        %1135 = vmatpush.msra.mxu0 %v1134
        %v1136 = vand.u32 %v408, 4294901760
        %1137 = vmatpush.msra.mxu0 %v1136
        %v1138 = vand.u32 %v407, 4294901760
        %1139 = vmatpush.msra.mxu0 %v1138
        %v1140 = vand.u32 %v406, 4294901760
        %1141 = vmatpush.msra.mxu0 %v1140
        %v1142 = vand.u32 %v405, 4294901760
        %1143 = vmatpush.msra.mxu0 %v1142
        %v1144 = vand.u32 %v404, 4294901760
        %1145 = vmatpush.msra.mxu0 %v1144
        %v1146 = vand.u32 %v403, 4294901760
        %1147 = vmatpush.msra.mxu0 %v1146
        %v1148 = vand.u32 %v402, 4294901760
        %1149 = vmatpush.msra.mxu0 %v1148
        %v1150 = vand.u32 %v401, 4294901760
        %1151 = vmatpush.msra.mxu0 %v1150
        %v1152 = vand.u32 %v400, 4294901760
        %1153 = vmatpush.msra.mxu0 %v1152
        %v1154 = vand.u32 %v399, 4294901760
        %1155 = vmatpush.msra.mxu0 %v1154
        %v1156 = vand.u32 %v368, 4294901760
        %1157 = vmatmul.f32.gmra.mxu0 %v1156
        %v1158 = vpop.f32.mrf.mxu0
        %v1159 = vadd.f32 %v1062, %v1158
        %v1160 = vand.u32 %v370, 4294901760
        %1161 = vmatmul.f32.gmra.mxu0 %v1160
        %v1162 = vpop.f32.mrf.mxu0
        %v1163 = vadd.f32 %v1066, %v1162
        %v1164 = vand.u32 %v372, 4294901760
        %1165 = vmatmul.f32.gmra.mxu0 %v1164
        %v1166 = vpop.f32.mrf.mxu0
        %v1167 = vadd.f32 %v1070, %v1166
        %v1168 = vand.u32 %v374, 4294901760
        %1169 = vmatmul.f32.gmra.mxu0 %v1168
        %v1170 = vpop.f32.mrf.mxu0
        %v1171 = vadd.f32 %v1074, %v1170
        %v1172 = vand.u32 %v376, 4294901760
        %1173 = vmatmul.f32.gmra.mxu0 %v1172
        %v1174 = vpop.f32.mrf.mxu0
        %v1175 = vadd.f32 %v1078, %v1174
        %v1176 = vand.u32 %v378, 4294901760
        %1177 = vmatmul.f32.gmra.mxu0 %v1176
        %v1178 = vpop.f32.mrf.mxu0
        %v1179 = vadd.f32 %v1082, %v1178
        %v1180 = vand.u32 %v380, 4294901760
        %1181 = vmatmul.f32.gmra.mxu0 %v1180
        %v1182 = vpop.f32.mrf.mxu0
        %v1183 = vadd.f32 %v1086, %v1182
        %v1184 = vand.u32 %v382, 4294901760
        %1185 = vmatmul.f32.gmra.mxu0 %v1184
        %v1186 = vpop.f32.mrf.mxu0
        %v1187 = vadd.f32 %v1090, %v1186
        %v1188 = vand.u32 %v384, 4294901760
        %1189 = vmatmul.f32.gmra.mxu0 %v1188
        %v1190 = vpop.f32.mrf.mxu0
        %v1191 = vadd.f32 %v1094, %v1190
        %v1192 = vand.u32 %v386, 4294901760
        %1193 = vmatmul.f32.gmra.mxu0 %v1192
        %v1194 = vpop.f32.mrf.mxu0
        %v1195 = vadd.f32 %v1098, %v1194
        %v1196 = vand.u32 %v388, 4294901760
        %1197 = vmatmul.f32.gmra.mxu0 %v1196
        %v1198 = vpop.f32.mrf.mxu0
        %v1199 = vadd.f32 %v1102, %v1198
        %v1200 = vand.u32 %v390, 4294901760
        %1201 = vmatmul.f32.gmra.mxu0 %v1200
        %v1202 = vpop.f32.mrf.mxu0
        %v1203 = vadd.f32 %v1106, %v1202
        %v1204 = vand.u32 %v392, 4294901760
        %1205 = vmatmul.f32.gmra.mxu0 %v1204
        %v1206 = vpop.f32.mrf.mxu0
        %v1207 = vadd.f32 %v1110, %v1206
        %v1208 = vand.u32 %v394, 4294901760
        %1209 = vmatmul.f32.gmra.mxu0 %v1208
        %v1210 = vpop.f32.mrf.mxu0
        %v1211 = vadd.f32 %v1114, %v1210
        %v1212 = vand.u32 %v396, 4294901760
        %1213 = vmatmul.f32.gmra.mxu0 %v1212
        %v1214 = vpop.f32.mrf.mxu0
        %v1215 = vadd.f32 %v1118, %v1214
        %v1216 = vand.u32 %v398, 4294901760
        %1217 = vmatmul.f32.gmra.mxu0 %v1216
        %v1218 = vpop.f32.mrf.mxu0
        %v1219 = vadd.f32 %v1122, %v1218
        %1220 = vdwg.mxu0
        %v1221 = vmax.f32 %v1159, 1e-30
        %v1222 = vmax.f32 %v1163, 1e-30
        %v1223 = vmax.f32 %v1167, 1e-30
        %v1224 = vmax.f32 %v1171, 1e-30
        %v1225 = vmax.f32 %v1175, 1e-30
        %v1226 = vmax.f32 %v1179, 1e-30
        %v1227 = vmax.f32 %v1183, 1e-30
        %v1228 = vmax.f32 %v1187, 1e-30
        %v1229 = vmax.f32 %v1191, 1e-30
        %v1230 = vmax.f32 %v1195, 1e-30
        %v1231 = vmax.f32 %v1199, 1e-30
        %v1232 = vmax.f32 %v1203, 1e-30
        %v1233 = vmax.f32 %v1207, 1e-30
        %v1234 = vmax.f32 %v1211, 1e-30
        %v1235 = vmax.f32 %v1215, 1e-30
        %v1236 = vmax.f32 %v1219, 1e-30
        %v1237 = vlog2.pop %v1221
        %v1238 = vmul.f32 %v1237, 0.6931472
        %v1239 = vlog2.pop %v1222
        %v1240 = vmul.f32 %v1239, 0.6931472
        %v1241 = vlog2.pop %v1223
        %v1242 = vmul.f32 %v1241, 0.6931472
        %v1243 = vlog2.pop %v1224
        %v1244 = vmul.f32 %v1243, 0.6931472
        %v1245 = vlog2.pop %v1225
        %v1246 = vmul.f32 %v1245, 0.6931472
        %v1247 = vlog2.pop %v1226
        %v1248 = vmul.f32 %v1247, 0.6931472
        %v1249 = vlog2.pop %v1227
        %v1250 = vmul.f32 %v1249, 0.6931472
        %v1251 = vlog2.pop %v1228
        %v1252 = vmul.f32 %v1251, 0.6931472
        %v1253 = vlog2.pop %v1229
        %v1254 = vmul.f32 %v1253, 0.6931472
        %v1255 = vlog2.pop %v1230
        %v1256 = vmul.f32 %v1255, 0.6931472
        %v1257 = vlog2.pop %v1231
        %v1258 = vmul.f32 %v1257, 0.6931472
        %v1259 = vlog2.pop %v1232
        %v1260 = vmul.f32 %v1259, 0.6931472
        %v1261 = vlog2.pop %v1233
        %v1262 = vmul.f32 %v1261, 0.6931472
        %v1263 = vlog2.pop %v1234
        %v1264 = vmul.f32 %v1263, 0.6931472
        %v1265 = vlog2.pop %v1235
        %v1266 = vmul.f32 %v1265, 0.6931472
        %v1267 = vlog2.pop %v1236
        %v1268 = vmul.f32 %v1267, 0.6931472
        %v1269 = vadd.f32 %v1238, %v320
        %v1270 = vadd.f32 %v1240, %v322
        %v1271 = vadd.f32 %v1242, %v324
        %v1272 = vadd.f32 %v1244, %v326
        %v1273 = vadd.f32 %v1246, %v328
        %v1274 = vadd.f32 %v1248, %v330
        %v1275 = vadd.f32 %v1250, %v332
        %v1276 = vadd.f32 %v1252, %v334
        %v1277 = vadd.f32 %v1254, %v336
        %v1278 = vadd.f32 %v1256, %v338
        %v1279 = vadd.f32 %v1258, %v340
        %v1280 = vadd.f32 %v1260, %v342
        %v1281 = vadd.f32 %v1262, %v344
        %v1282 = vadd.f32 %v1264, %v346
        %v1283 = vadd.f32 %v1266, %v348
        %v1284 = vadd.f32 %v1268, %v350
        %v1285 = vld [vmem:[%s258] sm:$0xff]
        %v1286 = vld [vmem:[%s258 + $0x8] sm:$0xff]
        %v1287 = vld [vmem:[%s258 + $0x10] sm:$0xff]
        %v1288 = vld [vmem:[%s258 + $0x18] sm:$0xff]
        %v1289 = vunpack.c.0.s8 %v1285
        %v1290 = vunpack.c.1.s8 %v1285
        %v1291 = vunpack.c.2.s8 %v1285
        %v1292 = vunpack.c.3.s8 %v1285
        %v1293 = vunpack.c.0.s8 %v1286
        %v1294 = vunpack.c.1.s8 %v1286
        %v1295 = vunpack.c.2.s8 %v1286
        %v1296 = vunpack.c.3.s8 %v1286
        %v1297 = vunpack.c.0.s8 %v1287
        %v1298 = vunpack.c.1.s8 %v1287
        %v1299 = vunpack.c.2.s8 %v1287
        %v1300 = vunpack.c.3.s8 %v1287
        %v1301 = vunpack.c.0.s8 %v1288
        %v1302 = vunpack.c.1.s8 %v1288
        %v1303 = vunpack.c.2.s8 %v1288
        %v1304 = vunpack.c.3.s8 %v1288
        %v1305 = vcvt.s32.f32 %v1289
        %v1306 = vcvt.s32.f32 %v1290
        %v1307 = vcvt.s32.f32 %v1291
        %v1308 = vcvt.s32.f32 %v1292
        %v1309 = vcvt.s32.f32 %v1293
        %v1310 = vcvt.s32.f32 %v1294
        %v1311 = vcvt.s32.f32 %v1295
        %v1312 = vcvt.s32.f32 %v1296
        %v1313 = vcvt.s32.f32 %v1297
        %v1314 = vcvt.s32.f32 %v1298
        %v1315 = vcvt.s32.f32 %v1299
        %v1316 = vcvt.s32.f32 %v1300
        %v1317 = vcvt.s32.f32 %v1301
        %v1318 = vcvt.s32.f32 %v1302
        %v1319 = vcvt.s32.f32 %v1303
        %v1320 = vcvt.s32.f32 %v1304
        %v1321 = vld [vmem:[%s2] sm:$0x1]
        %v1323 = vperm.slane %v1321, 0
        %v1325 = vmul.f32 %v1305, %v1323
        %v1326 = vmul.f32 %v1306, %v1323
        %v1327 = vmul.f32 %v1307, %v1323
        %v1328 = vmul.f32 %v1308, %v1323
        %v1329 = vmul.f32 %v1309, %v1323
        %v1330 = vmul.f32 %v1310, %v1323
        %v1331 = vmul.f32 %v1311, %v1323
        %v1332 = vmul.f32 %v1312, %v1323
        %v1333 = vmul.f32 %v1313, %v1323
        %v1334 = vmul.f32 %v1314, %v1323
        %v1335 = vmul.f32 %v1315, %v1323
        %v1336 = vmul.f32 %v1316, %v1323
        %v1337 = vmul.f32 %v1317, %v1323
        %v1338 = vmul.f32 %v1318, %v1323
        %v1339 = vmul.f32 %v1319, %v1323
        %v1340 = vmul.f32 %v1320, %v1323
        %v1341 = vsub.f32 %v1269, %v303
        %v1342 = vsub.f32 %v1270, %v304
        %v1343 = vsub.f32 %v1271, %v305
        %v1344 = vsub.f32 %v1272, %v306
        %v1345 = vsub.f32 %v1273, %v307
        %v1346 = vsub.f32 %v1274, %v308
        %v1347 = vsub.f32 %v1275, %v309
        %v1348 = vsub.f32 %v1276, %v310
        %v1349 = vsub.f32 %v1277, %v311
        %v1350 = vsub.f32 %v1278, %v312
        %v1351 = vsub.f32 %v1279, %v313
        %v1352 = vsub.f32 %v1280, %v314
        %v1353 = vsub.f32 %v1281, %v315
        %v1354 = vsub.f32 %v1282, %v316
        %v1355 = vsub.f32 %v1283, %v317
        %v1356 = vsub.f32 %v1284, %v318
        %v1357 = vmul.f32 %v1325, %v1341
        %v1358 = vmul.f32 %v1326, %v1342
        %v1359 = vmul.f32 %v1327, %v1343
        %v1360 = vmul.f32 %v1328, %v1344
        %v1361 = vmul.f32 %v1329, %v1345
        %v1362 = vmul.f32 %v1330, %v1346
        %v1363 = vmul.f32 %v1331, %v1347
        %v1364 = vmul.f32 %v1332, %v1348
        %v1365 = vmul.f32 %v1333, %v1349
        %v1366 = vmul.f32 %v1334, %v1350
        %v1367 = vmul.f32 %v1335, %v1351
        %v1368 = vmul.f32 %v1336, %v1352
        %v1369 = vmul.f32 %v1337, %v1353
        %v1370 = vmul.f32 %v1338, %v1354
        %v1371 = vmul.f32 %v1339, %v1355
        %v1372 = vmul.f32 %v1340, %v1356
        %v1373 = vld [vmem:[%s293] sm:$0xff]
        %v1374 = vadd.f32 %v1357, %v1358
        %v1375 = vadd.f32 %v1374, %v1359
        %v1376 = vadd.f32 %v1375, %v1360
        %v1377 = vadd.f32 %v1376, %v1361
        %v1378 = vadd.f32 %v1377, %v1362
        %v1379 = vadd.f32 %v1378, %v1363
        %v1380 = vadd.f32 %v1379, %v1364
        %v1381 = vadd.f32 %v1380, %v1365
        %v1382 = vadd.f32 %v1381, %v1366
        %v1383 = vadd.f32 %v1382, %v1367
        %v1384 = vadd.f32 %v1383, %v1368
        %v1385 = vadd.f32 %v1384, %v1369
        %v1386 = vadd.f32 %v1385, %v1370
        %v1387 = vadd.f32 %v1386, %v1371
        %v1388 = vadd.f32 %v1387, %v1372
        %v1389 = vadd.f32 %v1373, %v1388
        %1390 = vst [vmem:[%s293] sm:$0xff] %v1389
        %s1391 = sand.u32 %s142, 1
        %s1392 = scalar_lea.sflag [#allocation4], %s1391
        %s1393 = sand.u32 %s142, 1
        %s1394 = smul.addr %s1393, 8
        %s1395 = scalar_lea.vmem [#allocation8], %s1394
        // Predicated region
        $region53: #{tpu_custom_call.1} parent=35 // pred_check
          %p1396 = pneg %p152
        $region54: #{tpu_custom_call.1} parent=35 // pred_check_branch
          %1398 = sbr.rel (%p1396) target = $region56
        $region55: #{tpu_custom_call.1} parent=35 // pred_region
          %1400 = vsyncadd %s1392, 0
          %s1401 = smul.addr %s28, 8
          %s1402 = scalar_lea.hbm %s4, %s1401
          %s1404 = sshll.u32 %s1395, 4
          %s1405 = int_to_ptr.vmem [resolvable:$true] %s1404
          %s1406 = sshll.u32 %s1402, 4
          %s1407 = int_to_ptr.hbm [resolvable:$true] %s1406
          %1409 = dma.vmem_to_hbm [thread:$0]  %s1405, 128, %s1407, %s1392
        $region56: #{tpu_custom_call.1} parent=35 // pred_fallthru
          _
      $region36: #{tpu_custom_call.1} parent=5 // pred_fallthru
        _
      %p1410 = scmp.le.s32.totalorder 2, %s19
      // Predicated region
      $region57: #{tpu_custom_call.1} parent=5 // pred_check
        %p1411 = pneg %p1410
      $region58: #{tpu_custom_call.1} parent=5 // pred_check_branch
        %1413 = sbr.rel (%p1411) target = $region60
      $region59: #{tpu_custom_call.1} parent=5 // pred_region
        %s1414 = ssub.s32 %s19, 2
        // Predicated region
        $region61: #{tpu_custom_call.1} parent=59 // pred_check
          %p1415 = pneg %p158
        $region62: #{tpu_custom_call.1} parent=59 // pred_check_branch
          %1417 = sbr.rel (%p1415) target = $region64
        $region63: #{tpu_custom_call.1} parent=59 // pred_region
          %s1418 = sand.u32 %s143, 1
          %s1419 = scalar_lea.sflag [#allocation4], %s1418
          %s1420 = sand.u32 %s143, 1
          %s1421 = smul.addr %s1420, 8
          %s1422 = scalar_lea.vmem [#allocation8], %s1421
          %1424 = dma.done %s1419, 128
        $region64: #{tpu_custom_call.1} parent=59 // pred_fallthru
          _
      $region60: #{tpu_custom_call.1} parent=5 // pred_fallthru
        _
    $region6: #{tpu_custom_call.1} parent=1 // loop_footer
      %s23 = sadd.s32 1, %s19
    $region7: #{tpu_custom_call.1} parent=1 // loop_footer_branch
      %18 = sbr.rel target = $region3
    $region8: #{tpu_custom_call.1} parent=1 // loop_exit
      _
    %1425 = vsyncpa [#allocation3], 1
    %s1426 = scalar_lea.sflag [#allocation3], 1
    %1427 = vsyncpa %s1426, 1
    %1428 = vsyncpa [#allocation6], 1
    %s1429 = scalar_lea.sflag [#allocation6], 1
    %1430 = vsyncpa %s1429, 1
    %1431 = vsyncpa [#allocation4], 1
    %s1432 = scalar_lea.sflag [#allocation4], 1
    %1433 = vsyncpa %s1432, 1

</llo_original>
